<compile_context>
chip_gen: v7x
topology: tpu7x:2x2x1
jax: 0.10.0
libtpu: 0.0.40
codegen_flags: <defaults>
</compile_context>

<pallas_src>
import jax
import jax.numpy as jnp
from jax.experimental import pallas as pl
from jax.experimental.pallas import tpu as pltpu


def simple_mlp_kernel(x1_ref, x2_ref, w13_ref, b13_ref, w2c_ref, b2c_ref,
                      o1_ref, o2_ref):
    out_dim = o1_ref.shape[-1]
    # Lane-pack the two branches: (tm, 2*d_model), bf16 operands for the MXU.
    x = jnp.concatenate([x1_ref[...], x2_ref[...]], axis=-1).astype(jnp.bfloat16)
    # First layer (block-diag W1/W3) + bias + tanh, f32 accumulate.
    h = jnp.tanh(jnp.dot(x, w13_ref[...], preferred_element_type=jnp.float32)
                 + b13_ref[...])
    # TODO(synk): training-mode dropout (stochastic mask via pltpu.prng_*) not
    # implemented; eval-mode dropout is identity.
    # Shared second layer (block-diag W2/W2) -> one (tm, 2*out_dim) lane-dense slab.
    o = jnp.dot(h.astype(jnp.bfloat16), w2c_ref[...],
                preferred_element_type=jnp.float32) + b2c_ref[...]
    o1_ref[...] = o[:, :out_dim].astype(o1_ref.dtype)
    o2_ref[...] = o[:, out_dim:].astype(o2_ref.dtype)


def _weight_norm_dim_none(v, g):
    # PyTorch weight_norm(..., dim=None): w = g * v / ||v||_F, g is a scalar.
    return (g / jnp.sqrt(jnp.sum(v * v))) * v


def _block_diag(a, b):
    ra, ca = a.shape
    rb, cb = b.shape
    top = jnp.concatenate([a, jnp.zeros((ra, cb), a.dtype)], axis=1)
    bot = jnp.concatenate([jnp.zeros((rb, ca), b.dtype), b], axis=1)
    return jnp.concatenate([top, bot], axis=0)


def _round_down(x, m):
    return (x // m) * m


def _round_up(x, m):
    return ((x + m - 1) // m) * m


def _vmem_capacity_bytes():
    try:
        return int(pltpu.get_tpu_info().vmem_capacity_bytes)
    except Exception:
        return 64 << 20  # conservative (v7x per-TC VMEM); v5e/v6e have 128 MiB


def _tensorcores_per_chip():
    # Only v7x (among v5e/v6e/v7x) has 2 TensorCores per chip.
    try:
        kind = str(jax.devices()[0].device_kind).lower()
    except Exception:
        return 1
    return 2 if "v7" in kind else 1


def _choose_tm(n_rows, d_model, hid, out_dim, in_bytes, out_bytes,
               vmem_budget, num_cores):
    """Largest row tile (multiple of 8) fitting the VMEM budget; on 2-TC chips
    force >= 2 grid steps so the "parallel" axis can shard across cores."""
    n8 = max(8, _round_up(n_rows, 8))
    # Resident block-diag weights (bf16) + biases (f32); x2 for Pallas's default
    # double-buffer allocation on constant-index-map specs.
    weight_bytes = 2 * (2 * (4 * d_model * hid + 4 * hid * out_dim)
                        + 4 * (2 * hid + 2 * out_dim))
    # Per tile row: double-buffered x1/x2 and o1/o2 tiles + in-kernel temporaries.
    per_row = (2 * 2 * d_model * in_bytes            # x1,x2 streamed tiles
               + 2 * 2 * out_dim * out_bytes          # o1,o2 output tiles
               + 4 * (2 * hid + 2 * out_dim)          # f32 h / o slabs
               + 2 * (2 * d_model + 2 * hid))         # bf16 casts
    cap = (vmem_budget - weight_bytes) // max(per_row, 1)
    tm = max(8, _round_down(min(n8, cap), 8))
    if num_cores >= 2 and n8 >= 16:
        tm = min(tm, max(8, _round_up(n8 // 2, 8)))
    return tm


def simple_mlp_forward(x1, x2, params, *, tm=None, out_dtype=jnp.bfloat16):
    """Fused SimpleMLP forward.

    params: v1/g1/b1 (proj1), v3/g3/b3 (proj3), v2/g2/b2 (proj2); v* in PyTorch
    nn.Linear layout (out_features, in_features), g* scalars (weight_norm dim=None).
    Returns (out1, out2), each (*leading, out_dim).
    """
    assert x1.shape == x2.shape, "fused kernel expects matching x1/x2 shapes"
    *lead, d_model = x1.shape

    # Compose weight_norm weights in f32, transpose to (in, out), block-diag pack,
    # then cast the packed weights to bf16 once for the MXU.
    w1 = _weight_norm_dim_none(params["v1"], params["g1"]).T
    w3 = _weight_norm_dim_none(params["v3"], params["g3"]).T
    w2 = _weight_norm_dim_none(params["v2"], params["g2"]).T
    hid, out_dim = w2.shape
    w13 = _block_diag(w1, w3).astype(jnp.bfloat16)    # (2*d_model, 2*hid)
    w2c = _block_diag(w2, w2).astype(jnp.bfloat16)    # (2*hid,     2*out_dim)
    b13 = jnp.concatenate([params["b1"], params["b3"]]
                          ).reshape(1, 2 * hid).astype(jnp.float32)
    b2c = jnp.concatenate([params["b2"], params["b2"]]
                          ).reshape(1, 2 * out_dim).astype(jnp.float32)

    n = 1
    for s in lead:
        n *= s
    # Stream x in its native dtype (cast to bf16 inside the kernel only).
    x1f = x1.reshape(n, d_model)
    x2f = x2.reshape(n, d_model)

    in_bytes = x1f.dtype.itemsize
    out_bytes = jnp.dtype(out_dtype).itemsize
    vmem_budget = (3 * _vmem_capacity_bytes()) // 4
    num_cores = _tensorcores_per_chip()

    if tm is None:
        tm = _choose_tm(n, d_model, hid, out_dim, in_bytes, out_bytes,
                        vmem_budget, num_cores)
    if n < 8:
        tm = n                                   # single full-array block
    else:
        tm = max(8, _round_up(int(tm), 8))
        tm = min(tm, _round_up(n, 8))
    grid = (pl.cdiv(n, tm),)                     # masked tail tile, no pad copy

    cost = pl.CostEstimate(
        flops=8 * n * (d_model * hid + hid * out_dim),
        transcendentals=2 * n * hid,
        bytes_accessed=(2 * n * d_model * in_bytes
                        + (w13.size + w2c.size) * 2
                        + (b13.size + b2c.size) * 4
                        + 2 * n * out_dim * out_bytes),
    )

    row_spec = pl.BlockSpec((tm, d_model), lambda i: (i, 0))
    out_spec = pl.BlockSpec((tm, out_dim), lambda i: (i, 0))

    def const(shape):
        return pl.BlockSpec(shape, lambda i: (0, 0))

    o1, o2 = pl.pallas_call(
        simple_mlp_kernel,
        out_shape=(jax.ShapeDtypeStruct((n, out_dim), out_dtype),
                   jax.ShapeDtypeStruct((n, out_dim), out_dtype)),
        grid_spec=pltpu.PrefetchScalarGridSpec(
            num_scalar_prefetch=0,
            grid=grid,
            in_specs=[
                row_spec,                        # x1 tile
                row_spec,                        # x2 tile
                const((2 * d_model, 2 * hid)),   # W13 = diag(W1, W3), bf16, resident
                const((1, 2 * hid)),             # b1 | b3
                const((2 * hid, 2 * out_dim)),   # W2c = diag(W2, W2), bf16, resident
                const((1, 2 * out_dim)),         # b2 | b2
            ],
            out_specs=(out_spec, out_spec),
        ),
        compiler_params=pltpu.CompilerParams(
            dimension_semantics=("parallel",),
            vmem_limit_bytes=int(vmem_budget)),
        cost_estimate=cost,
    )(x1f, x2f, w13, b13, w2c, b2c)

    return o1.reshape(*lead, out_dim), o2.reshape(*lead, out_dim)


if __name__ == "__main__":
    batch, seq, d_model, hid_dim, out_dim = 2, 8, 32, 32, 128

    key = jax.random.PRNGKey(0)
    kx1, kx2, kv1, kv3, kv2, kb1, kb3, kb2 = jax.random.split(key, 8)

    x1 = jax.random.normal(kx1, (batch, seq, d_model), dtype=jnp.float32)
    x2 = jax.random.normal(kx2, (batch, seq, d_model), dtype=jnp.float32)

    params = {
        "v1": jax.random.normal(kv1, (hid_dim, d_model), jnp.float32) * 0.05,
        "g1": jnp.float32(1.3),
        "b1": jax.random.normal(kb1, (hid_dim,), jnp.float32) * 0.05,
        "v3": jax.random.normal(kv3, (hid_dim, d_model), jnp.float32) * 0.05,
        "g3": jnp.float32(0.7),
        "b3": jax.random.normal(kb3, (hid_dim,), jnp.float32) * 0.05,
        "v2": jax.random.normal(kv2, (out_dim, hid_dim), jnp.float32) * 0.05,
        "g2": jnp.float32(1.1),
        "b2": jax.random.normal(kb2, (out_dim,), jnp.float32) * 0.05,
    }

    o1, o2 = simple_mlp_forward(x1, x2, params)
    o1 = jax.block_until_ready(o1)
    o2 = jax.block_until_ready(o2)

    # Pure-JAX f32 reference (dropout is identity in eval mode).
    def eff(v, g):
        return (g / jnp.sqrt(jnp.sum(v * v))) * v

    w1r = eff(params["v1"], params["g1"]).T
    w3r = eff(params["v3"], params["g3"]).T
    w2r = eff(params["v2"], params["g2"]).T
    r1 = jnp.tanh(x1 @ w1r + params["b1"]) @ w2r + params["b2"]
    r2 = jnp.tanh(x2 @ w3r + params["b3"]) @ w2r + params["b2"]

    assert o1.shape == (batch, seq, out_dim) and o2.shape == (batch, seq, out_dim)
    # bf16 MXU operands + bf16 outputs with f32 accumulate -> relaxed tolerance.
    assert jnp.allclose(o1.astype(jnp.float32), r1, atol=2e-2, rtol=2e-2)
    assert jnp.allclose(o2.astype(jnp.float32), r2, atol=2e-2, rtol=2e-2)

    print("KERNEL_OK")
</pallas_src>

<mosaic_0001>
module attributes {stable_mosaic.version = 11 : i64} {
  func.func @simple_mlp_kernel(%arg0: i32, %arg1: memref<16x32xf32, #tpu.memory_space<vmem>>, %arg2: memref<16x32xf32, #tpu.memory_space<vmem>>, %arg3: memref<64x64xbf16, #tpu.memory_space<vmem>>, %arg4: memref<1x64xf32, #tpu.memory_space<vmem>>, %arg5: memref<64x256xbf16, #tpu.memory_space<vmem>>, %arg6: memref<1x256xf32, #tpu.memory_space<vmem>>, %arg7: memref<16x128xbf16, #tpu.memory_space<vmem>>, %arg8: memref<16x128xbf16, #tpu.memory_space<vmem>>) attributes {dimension_semantics = [#tpu.dimension_semantics<parallel>], iteration_bounds = array<i64: 1>, scalar_prefetch = 0 : i64, scratch_operands = 0 : i64, tpu.core_type = #tpu.core_type<tc>, window_params = [{transform_indices = @transform_0, window_bounds = array<i64: 16, 32>}, {transform_indices = @transform_1, window_bounds = array<i64: 16, 32>}, {pipeline_mode = #tpu.pipeline_mode<synchronous>, transform_indices = @transform_2, window_bounds = array<i64: 64, 64>}, {pipeline_mode = #tpu.pipeline_mode<synchronous>, transform_indices = @transform_3, window_bounds = array<i64: 1, 64>}, {pipeline_mode = #tpu.pipeline_mode<synchronous>, transform_indices = @transform_4, window_bounds = array<i64: 64, 256>}, {pipeline_mode = #tpu.pipeline_mode<synchronous>, transform_indices = @transform_5, window_bounds = array<i64: 1, 256>}, {transform_indices = @transform_6, window_bounds = array<i64: 16, 128>}, {transform_indices = @transform_7, window_bounds = array<i64: 16, 128>}]} {
    %c0 = arith.constant 0 : index
    %c0_0 = arith.constant 0 : index
    %0 = vector.load %arg1[%c0, %c0_0] : memref<16x32xf32, #tpu.memory_space<vmem>>, vector<16x32xf32>
    %c0_1 = arith.constant 0 : index
    %c0_2 = arith.constant 0 : index
    %1 = vector.load %arg2[%c0_1, %c0_2] : memref<16x32xf32, #tpu.memory_space<vmem>>, vector<16x32xf32>
    %2 = tpu.concatenate %0, %1 in 1 : vector<16x32xf32>, vector<16x32xf32> -> vector<16x64xf32>
    %3 = arith.truncf %2 : vector<16x64xf32> to vector<16x64xbf16>
    %c0_3 = arith.constant 0 : index
    %c0_4 = arith.constant 0 : index
    %4 = vector.load %arg3[%c0_3, %c0_4] : memref<64x64xbf16, #tpu.memory_space<vmem>>, vector<64x64xbf16>
    %cst = arith.constant dense<0.000000e+00> : vector<16x64xf32>
    %5 = tpu.matmul %3, %4, %cst {dimension_numbers = #tpu.dot_dimension_numbers<[1], [0], [0], [1], [0, 0, 1, 1], [], []>} : vector<16x64xbf16>, vector<64x64xbf16>, vector<16x64xf32> -> vector<16x64xf32>
    %c0_5 = arith.constant 0 : index
    %c0_6 = arith.constant 0 : index
    %6 = vector.load %arg4[%c0_5, %c0_6] : memref<1x64xf32, #tpu.memory_space<vmem>>, vector<1x64xf32>
    %7 = vector.broadcast %6 : vector<1x64xf32> to vector<16x64xf32>
    %8 = arith.addf %5, %7 : vector<16x64xf32>
    %9 = math.tanh %8 : vector<16x64xf32>
    %10 = arith.truncf %9 : vector<16x64xf32> to vector<16x64xbf16>
    %c0_7 = arith.constant 0 : index
    %c0_8 = arith.constant 0 : index
    %11 = vector.load %arg5[%c0_7, %c0_8] : memref<64x256xbf16, #tpu.memory_space<vmem>>, vector<64x256xbf16>
    %cst_9 = arith.constant dense<0.000000e+00> : vector<16x256xf32>
    %12 = tpu.matmul %10, %11, %cst_9 {dimension_numbers = #tpu.dot_dimension_numbers<[1], [0], [0], [1], [0, 0, 1, 1], [], []>} : vector<16x64xbf16>, vector<64x256xbf16>, vector<16x256xf32> -> vector<16x256xf32>
    %c0_10 = arith.constant 0 : index
    %c0_11 = arith.constant 0 : index
    %13 = vector.load %arg6[%c0_10, %c0_11] : memref<1x256xf32, #tpu.memory_space<vmem>>, vector<1x256xf32>
    %14 = vector.broadcast %13 : vector<1x256xf32> to vector<16x256xf32>
    %15 = arith.addf %12, %14 : vector<16x256xf32>
    %16 = vector.extract_strided_slice %15 {offsets = [0, 0], sizes = [16, 128], strides = [1, 1]} : vector<16x256xf32> to vector<16x128xf32>
    %17 = arith.truncf %16 : vector<16x128xf32> to vector<16x128xbf16>
    %c0_12 = arith.constant 0 : index
    %c0_13 = arith.constant 0 : index
    %18 = vector.load %arg7[%c0_12, %c0_13] : memref<16x128xbf16, #tpu.memory_space<vmem>>, vector<16x128xbf16>
    tpu.vector_store %arg7[%c0_12, %c0_13], %17 {strides = array<i32>} : memref<16x128xbf16, #tpu.memory_space<vmem>>, vector<16x128xbf16>,
    %19 = vector.extract_strided_slice %15 {offsets = [0, 128], sizes = [16, 128], strides = [1, 1]} : vector<16x256xf32> to vector<16x128xf32>
    %20 = arith.truncf %19 : vector<16x128xf32> to vector<16x128xbf16>
    %c0_14 = arith.constant 0 : index
    %c0_15 = arith.constant 0 : index
    %21 = vector.load %arg8[%c0_14, %c0_15] : memref<16x128xbf16, #tpu.memory_space<vmem>>, vector<16x128xbf16>
    tpu.vector_store %arg8[%c0_14, %c0_15], %20 {strides = array<i32>} : memref<16x128xbf16, #tpu.memory_space<vmem>>, vector<16x128xbf16>,
    return
  }
  func.func @transform_0(%arg0: i32) -> (i32, i32) {
    %c0_i32 = arith.constant 0 : i32
    %c0_i32_0 = arith.constant 0 : i32
    return %arg0, %c0_i32 : i32, i32
  }
  func.func @transform_1(%arg0: i32) -> (i32, i32) {
    %c0_i32 = arith.constant 0 : i32
    %c0_i32_0 = arith.constant 0 : i32
    return %arg0, %c0_i32 : i32, i32
  }
  func.func @transform_2(%arg0: i32) -> (i32, i32) {
    %c0_i32 = arith.constant 0 : i32
    %c0_i32_0 = arith.constant 0 : i32
    %c0_i32_1 = arith.constant 0 : i32
    return %c0_i32, %c0_i32_0 : i32, i32
  }
  func.func @transform_3(%arg0: i32) -> (i32, i32) {
    %c0_i32 = arith.constant 0 : i32
    %c0_i32_0 = arith.constant 0 : i32
    %c0_i32_1 = arith.constant 0 : i32
    return %c0_i32, %c0_i32_0 : i32, i32
  }
  func.func @transform_4(%arg0: i32) -> (i32, i32) {
    %c0_i32 = arith.constant 0 : i32
    %c0_i32_0 = arith.constant 0 : i32
    %c0_i32_1 = arith.constant 0 : i32
    return %c0_i32, %c0_i32_0 : i32, i32
  }
  func.func @transform_5(%arg0: i32) -> (i32, i32) {
    %c0_i32 = arith.constant 0 : i32
    %c0_i32_0 = arith.constant 0 : i32
    %c0_i32_1 = arith.constant 0 : i32
    return %c0_i32, %c0_i32_0 : i32, i32
  }
  func.func @transform_6(%arg0: i32) -> (i32, i32) {
    %c0_i32 = arith.constant 0 : i32
    %c0_i32_0 = arith.constant 0 : i32
    return %arg0, %c0_i32 : i32, i32
  }
  func.func @transform_7(%arg0: i32) -> (i32, i32) {
    %c0_i32 = arith.constant 0 : i32
    %c0_i32_0 = arith.constant 0 : i32
    return %arg0, %c0_i32 : i32, i32
  }
}

</mosaic_0001>

<llo_original>
// kernel: tpu_custom_call.1
$region0: #{tpu_custom_call.1}
  #allocation0 [shape = 'u32[]', space=smem, size = 0x4, offset = 0x4, fixed_abs, tag = 'smem constant byte address 0x4 - core index']
  #allocation1 [shape = 'u32[144,128]{1,0:T(1,128)}', space=vmem, size = 0x12000, scoped, tag = 'internal scratch']
  %s0 = inlined_call_operand.hbm [shape: f32[16,32], index: 0, kind: input, shape index: {}]
  %s1 = inlined_call_operand.hbm [shape: f32[16,32], index: 1, kind: input, shape index: {}]
  %s2 = inlined_call_operand.hbm [shape: bf16[64,64], index: 2, kind: input, shape index: {}]
  %s3 = inlined_call_operand.vmem [shape: f32[1,64], index: 3, kind: input, shape index: {}]
  %s4 = inlined_call_operand.hbm [shape: bf16[64,256], index: 4, kind: input, shape index: {}]
  %s5 = inlined_call_operand.vmem [shape: f32[1,256], index: 5, kind: input, shape index: {}]
  %s6 = inlined_call_operand.hbm [shape: bf16[16,128], index: 6, kind: output, shape index: {0}]
  %s7 = inlined_call_operand.hbm [shape: bf16[16,128], index: 7, kind: output, shape index: {1}]
  %8 = xla_tuple %s6, %s7
  %s9 = sld [smem:[#allocation0]]
  $region58: #{tpu_custom_call.1} parent=0
    _
  %s11 = ssub.s32 1, %s9
  %s12 = scalar_select 0, %s11, %s9
  $region1: #{tpu_custom_call.1} parent=0
    #allocation2 [shape = 'u8[8192]{0}', space=vmem, size = 0x2000, scoped, tag = 'input window, operand 0, single buffered']
    #allocation3 [shape = 's32[1]{0}', space=sflag, size = 0x4, scoped, tag = 'scoped memory for tpu_custom_call.1']
    #allocation4 [shape = 's32[1]{0}', space=sflag, size = 0x4, scoped, tag = 'scoped memory for tpu_custom_call.1']
    #allocation5 [shape = 'u8[8192]{0}', space=vmem, size = 0x2000, scoped, tag = 'input window, operand 1, single buffered']
    #allocation6 [shape = 's32[1]{0}', space=sflag, size = 0x4, scoped, tag = 'scoped memory for tpu_custom_call.1']
    #allocation7 [shape = 'u8[16384]{0}', space=vmem, size = 0x4000, scoped, tag = 'input window, operand 2, single buffered']
    #allocation8 [shape = 'u8[32768]{0}', space=vmem, size = 0x8000, scoped, tag = 'input window, operand 4, single buffered']
    #allocation9 [shape = 's32[1]{0}', space=sflag, size = 0x4, scoped, tag = 'scoped memory for tpu_custom_call.1']
    #allocation10 [shape = 'u8[4096]{0}', space=vmem, size = 0x1000, scoped, tag = 'output window, operand 0, single buffered']
    #allocation11 [shape = 'u8[4096]{0}', space=vmem, size = 0x1000, scoped, tag = 'output window, operand 1, single buffered']
    #allocation12 [shape = 's32[1]{0}', space=sflag, size = 0x4, scoped, tag = 'scoped memory for tpu_custom_call.1']
    %13 = vsyncpa [#allocation3], 0
    %14 = vsyncpa [#allocation6], 0
    %15 = vsyncpa [#allocation9], 0
    %16 = vsyncpa [#allocation4], 0
    %17 = vsyncpa [#allocation12], 0
    // Predicated region
    $region2: #{tpu_custom_call.1} parent=1 // pred_check
      _
    $region3: #{tpu_custom_call.1} parent=1 // pred_check_branch
      %19 = sbr.rel (0) target = $region5
    $region4: #{tpu_custom_call.1} parent=1 // pred_region
      %s21 = ssub.s32 256, 256
      %22 = vsyncadd [#allocation3], %s21
      %s23 = sshll.u32 [#allocation2], 4
      %s24 = int_to_ptr.vmem [resolvable:$true] %s23
      %29 = dma.hbm_to_vmem [thread:$0]  %s0, 256, %s24, [#allocation3], 128, 128, 8
    $region5: #{tpu_custom_call.1} parent=1 // pred_fallthru
      _
    // Predicated region
    $region6: #{tpu_custom_call.1} parent=1 // pred_check
      _
    $region7: #{tpu_custom_call.1} parent=1 // pred_check_branch
      %31 = sbr.rel (0) target = $region9
    $region8: #{tpu_custom_call.1} parent=1 // pred_region
      %s33 = ssub.s32 256, 256
      %34 = vsyncadd [#allocation6], %s33
      %s35 = sshll.u32 [#allocation5], 4
      %s36 = int_to_ptr.vmem [resolvable:$true] %s35
      %41 = dma.hbm_to_vmem [thread:$0]  %s1, 256, %s36, [#allocation6], 128, 128, 8
    $region9: #{tpu_custom_call.1} parent=1 // pred_fallthru
      _
    // Predicated region
    $region10: #{tpu_custom_call.1} parent=1 // pred_check
      _
    $region11: #{tpu_custom_call.1} parent=1 // pred_check_branch
      %43 = sbr.rel (0) target = $region13
    $region12: #{tpu_custom_call.1} parent=1 // pred_region
      %s45 = ssub.s32 512, 512
      %46 = vsyncadd [#allocation6], %s45
      %s47 = sshll.u32 [#allocation7], 4
      %s48 = int_to_ptr.vmem [resolvable:$true] %s47
      %53 = dma.hbm_to_vmem [thread:$0]  %s2, 512, %s48, [#allocation6], 64, 64, 4
    $region13: #{tpu_custom_call.1} parent=1 // pred_fallthru
      _
    // Predicated region
    $region14: #{tpu_custom_call.1} parent=1 // pred_check
      _
    $region15: #{tpu_custom_call.1} parent=1 // pred_check_branch
      %55 = sbr.rel (0) target = $region17
    $region16: #{tpu_custom_call.1} parent=1 // pred_region
      _
    $region17: #{tpu_custom_call.1} parent=1 // pred_fallthru
      _
    // Predicated region
    $region18: #{tpu_custom_call.1} parent=1 // pred_check
      _
    $region19: #{tpu_custom_call.1} parent=1 // pred_check_branch
      %57 = sbr.rel (0) target = $region21
    $region20: #{tpu_custom_call.1} parent=1 // pred_region
      %s59 = ssub.s32 1024, 1024
      %60 = vsyncadd [#allocation9], %s59
      %s61 = sshll.u32 [#allocation8], 4
      %s62 = int_to_ptr.vmem [resolvable:$true] %s61
      %67 = dma.hbm_to_vmem [thread:$0]  %s4, 1024, %s62, [#allocation9], 128, 128, 8
    $region21: #{tpu_custom_call.1} parent=1 // pred_fallthru
      _
    // Predicated region
    $region22: #{tpu_custom_call.1} parent=1 // pred_check
      _
    $region23: #{tpu_custom_call.1} parent=1 // pred_check_branch
      %69 = sbr.rel (0) target = $region25
    $region24: #{tpu_custom_call.1} parent=1 // pred_region
      _
    $region25: #{tpu_custom_call.1} parent=1 // pred_fallthru
      _
    // Predicated region
    $region26: #{tpu_custom_call.1} parent=1 // pred_check
      _
    $region27: #{tpu_custom_call.1} parent=1 // pred_check_branch
      %71 = sbr.rel (0) target = $region29
    $region28: #{tpu_custom_call.1} parent=1 // pred_region
      %72 = dma.done [#allocation3], 256
    $region29: #{tpu_custom_call.1} parent=1 // pred_fallthru
      _
    // Predicated region
    $region30: #{tpu_custom_call.1} parent=1 // pred_check
      _
    $region31: #{tpu_custom_call.1} parent=1 // pred_check_branch
      %74 = sbr.rel (0) target = $region33
    $region32: #{tpu_custom_call.1} parent=1 // pred_region
      %75 = dma.done [#allocation6], 256
    $region33: #{tpu_custom_call.1} parent=1 // pred_fallthru
      _
    // Predicated region
    $region34: #{tpu_custom_call.1} parent=1 // pred_check
      _
    $region35: #{tpu_custom_call.1} parent=1 // pred_check_branch
      %77 = sbr.rel (0) target = $region37
    $region36: #{tpu_custom_call.1} parent=1 // pred_region
      %78 = dma.done [#allocation6], 512
    $region37: #{tpu_custom_call.1} parent=1 // pred_fallthru
      _
    // Predicated region
    $region38: #{tpu_custom_call.1} parent=1 // pred_check
      _
    $region39: #{tpu_custom_call.1} parent=1 // pred_check_branch
      %80 = sbr.rel (0) target = $region41
    $region40: #{tpu_custom_call.1} parent=1 // pred_region
      %81 = dma.done [#allocation9], 1024
    $region41: #{tpu_custom_call.1} parent=1 // pred_fallthru
      _
    %v83 = vld [vmem:[#allocation2] sm:$0xff]
    %v84 = vld [vmem:[#allocation2 + $0x8] sm:$0xff]
    %v85 = vld [vmem:[#allocation5] sm:$0xff]
    %v86 = vld [vmem:[#allocation5 + $0x8] sm:$0xff]
    %89 = vrot.lane.b32.xlu0 %v85, 32
    %v90 = vpop.permute.xlu0 %89
    %91 = vrot.lane.b32.xlu0 %v86, 32
    %v92 = vpop.permute.xlu0 %91
    %vm95 = vcmask 261120
    %v96 = vsel %vm95, %v83, %v90
    %v97 = vsel %vm95, %v84, %v92
    %v98 = vpack.c.bf16 %v97, %v96
    %v99 = vld [vmem:[#allocation7] sm:$0xf]
    %v100 = vld [vmem:[#allocation7 + $0x4] sm:$0xf]
    %v101 = vld [vmem:[#allocation7 + $0x8] sm:$0xf]
    %v102 = vld [vmem:[#allocation7 + $0xc] sm:$0xf]
    %v103 = vld [vmem:[#allocation7 + $0x10] sm:$0xf]
    %v104 = vld [vmem:[#allocation7 + $0x14] sm:$0xf]
    %v105 = vld [vmem:[#allocation7 + $0x18] sm:$0xf]
    %v106 = vld [vmem:[#allocation7 + $0x1c] sm:$0xf]
    %v107 = vld [vmem:[%s3] sm:$0x1]
    %v109 = vlaneseq
    %v110 = vshrl.u32 %v109, 7
    %v111 = vsub.s32 0, %v110
    %v112 = vrot.slane %v107, %v111
    %v122 = vunpack.c.l.b16 %v99
    %v123 = vunpack.c.l.b16 %v100
    %v124 = vunpack.c.l.b16 %v101
    %v125 = vunpack.c.l.b16 %v102
    %v126 = vunpack.c.l.b16 %v103
    %v127 = vunpack.c.l.b16 %v104
    %v128 = vunpack.c.l.b16 %v105
    %v129 = vunpack.c.l.b16 %v106
    %v130 = vpack.c.b16 %v123, %v122
    %v131 = vpack.c.b16 %v125, %v124
    %v132 = vpack.c.b16 %v127, %v126
    %v133 = vpack.c.b16 %v129, %v128
    %vm138 = vcmask 523264
    %v140 = vsel %vm138, %v98, 0
    %142 = vmatprep.subr.bf16.mxu0 0
    %143 = vmatpush1.bf16.msra.mxu0 %v130
    %144 = vmatprep.subr.bf16.mxu0 0
    %145 = vmatpush1.bf16.msra.mxu0 %v131
    %146 = vmatprep.subr.bf16.mxu0 0
    %147 = vmatpush1.bf16.msra.mxu0 %v132
    %148 = vmatprep.subr.bf16.mxu0 0
    %149 = vmatpush1.bf16.msra.mxu0 %v133
    %150 = vmatprep.subr.bf16.mxu0 0
    %151 = vmatpush1.bf16.msra.mxu0 0
    %152 = vmatprep.subr.bf16.mxu0 0
    %153 = vmatpush1.bf16.msra.mxu0 0
    %154 = vmatprep.subr.bf16.mxu0 0
    %155 = vmatpush1.bf16.msra.mxu0 0
    %156 = vmatprep.subr.bf16.mxu0 0
    %157 = vmatpush1.bf16.msra.mxu0 0
    %158 = vmatprep.subr.bf16.mxu0 0
    %159 = vmatpush1.bf16.msra.mxu0 0
    %160 = vmatprep.subr.bf16.mxu0 0
    %161 = vmatpush1.bf16.msra.mxu0 0
    %162 = vmatprep.subr.bf16.mxu0 0
    %163 = vmatpush1.bf16.msra.mxu0 0
    %164 = vmatprep.subr.bf16.mxu0 0
    %165 = vmatpush1.bf16.msra.mxu0 0
    %166 = vmatprep.subr.bf16.mxu0 0
    %167 = vmatpush1.bf16.msra.mxu0 0
    %168 = vmatprep.subr.bf16.mxu0 0
    %169 = vmatpush1.bf16.msra.mxu0 0
    %170 = vmatprep.subr.bf16.mxu0 0
    %171 = vmatpush1.bf16.msra.mxu0 0
    %172 = vmatprep.subr.bf16.mxu0 0
    %173 = vmatpush1.bf16.msra.mxu0 0
    %174 = vmatprep.mubr.bf16.mxu0 0
    %175 = vmatmul.mubr.bf16.gmra.mrb[0].mxu0 %v140
    %v176 = vpop.f32.mrb[0].mxu0
    %v177 = vadd.f32 %v112, %v176
    %v178 = vpop.f32.mrb[0].mxu0
    %v179 = vpop.f32.mrb[0].mxu0
    %v180 = vadd.f32 %v112, %v179
    %v181 = vpop.f32.mrb[0].mxu0
    %182 = vdwg.mxu0
    %v183 = vtanh.pop %v177
    %v184 = vtanh.pop %v180
    %v185 = vpack.c.bf16 %v184, %v183
    %v186 = vld [vmem:[#allocation8] sm:$0xff]
    %v187 = vld [vmem:[#allocation8 + $0x8] sm:$0xff]
    %v188 = vld [vmem:[#allocation8 + $0x10] sm:$0xff]
    %v189 = vld [vmem:[#allocation8 + $0x18] sm:$0xff]
    %v190 = vld [vmem:[#allocation8 + $0x20] sm:$0xff]
    %v191 = vld [vmem:[#allocation8 + $0x28] sm:$0xff]
    %v192 = vld [vmem:[#allocation8 + $0x30] sm:$0xff]
    %v193 = vld [vmem:[#allocation8 + $0x38] sm:$0xff]
    %v194 = vld [vmem:[%s5] sm:$0x3]
    %v196 = vlaneseq
    %v197 = vshrl.u32 %v196, 7
    %v198 = vsub.s32 0, %v197
    %v199 = vrot.slane %v194, %v198
    %v200 = vlaneseq
    %v201 = vshrl.u32 %v200, 7
    %v202 = vsub.s32 1, %v201
    %v203 = vrot.slane %v194, %v202
    %v214 = vunpack.c.l.b16 %v186
    %v215 = vunpack.c.h.b16 %v186
    %v216 = vunpack.c.l.b16 %v187
    %v217 = vunpack.c.h.b16 %v187
    %v218 = vunpack.c.l.b16 %v188
    %v219 = vunpack.c.h.b16 %v188
    %v220 = vunpack.c.l.b16 %v189
    %v221 = vunpack.c.h.b16 %v189
    %v222 = vunpack.c.l.b16 %v190
    %v223 = vunpack.c.h.b16 %v190
    %v224 = vunpack.c.l.b16 %v191
    %v225 = vunpack.c.h.b16 %v191
    %v226 = vunpack.c.l.b16 %v192
    %v227 = vunpack.c.h.b16 %v192
    %v228 = vunpack.c.l.b16 %v193
    %v229 = vunpack.c.h.b16 %v193
    %v230 = vpack.c.b16 %v216, %v214
    %v231 = vpack.c.b16 %v217, %v215
    %v232 = vpack.c.b16 %v220, %v218
    %v233 = vpack.c.b16 %v221, %v219
    %v234 = vpack.c.b16 %v224, %v222
    %v235 = vpack.c.b16 %v225, %v223
    %v236 = vpack.c.b16 %v228, %v226
    %v237 = vpack.c.b16 %v229, %v227
    %v247 = vsel %vm138, %v185, 0
    %249 = vmatprep.subr.bf16.mxu0 %v231
    %250 = vmatpush1.bf16.msra.mxu0 %v230
    %251 = vmatprep.subr.bf16.mxu0 %v233
    %252 = vmatpush1.bf16.msra.mxu0 %v232
    %253 = vmatprep.subr.bf16.mxu0 %v235
    %254 = vmatpush1.bf16.msra.mxu0 %v234
    %255 = vmatprep.subr.bf16.mxu0 %v237
    %256 = vmatpush1.bf16.msra.mxu0 %v236
    %257 = vmatprep.subr.bf16.mxu0 0
    %258 = vmatpush1.bf16.msra.mxu0 0
    %259 = vmatprep.subr.bf16.mxu0 0
    %260 = vmatpush1.bf16.msra.mxu0 0
    %261 = vmatprep.subr.bf16.mxu0 0
    %262 = vmatpush1.bf16.msra.mxu0 0
    %263 = vmatprep.subr.bf16.mxu0 0
    %264 = vmatpush1.bf16.msra.mxu0 0
    %265 = vmatprep.subr.bf16.mxu0 0
    %266 = vmatpush1.bf16.msra.mxu0 0
    %267 = vmatprep.subr.bf16.mxu0 0
    %268 = vmatpush1.bf16.msra.mxu0 0
    %269 = vmatprep.subr.bf16.mxu0 0
    %270 = vmatpush1.bf16.msra.mxu0 0
    %271 = vmatprep.subr.bf16.mxu0 0
    %272 = vmatpush1.bf16.msra.mxu0 0
    %273 = vmatprep.subr.bf16.mxu0 0
    %274 = vmatpush1.bf16.msra.mxu0 0
    %275 = vmatprep.subr.bf16.mxu0 0
    %276 = vmatpush1.bf16.msra.mxu0 0
    %277 = vmatprep.subr.bf16.mxu0 0
    %278 = vmatpush1.bf16.msra.mxu0 0
    %279 = vmatprep.subr.bf16.mxu0 0
    %280 = vmatpush1.bf16.msra.mxu0 0
    %281 = vmatprep.mubr.bf16.mxu0 0
    %282 = vmatmul.mubr.bf16.gmra.mrb[0].mxu0 %v247
    %v283 = vpop.f32.mrb[0].mxu0
    %v284 = vadd.f32 %v199, %v283
    %v285 = vpop.f32.mrb[0].mxu0
    %v286 = vadd.f32 %v203, %v285
    %v287 = vpop.f32.mrb[0].mxu0
    %v288 = vadd.f32 %v199, %v287
    %v289 = vpop.f32.mrb[0].mxu0
    %v290 = vadd.f32 %v203, %v289
    %291 = vdwg.mxu0
    %v292 = vpack.c.bf16 %v288, %v284
    %v294 = vunpack.c.l.b16 %v292
    %v295 = vunpack.c.h.b16 %v292
    %v296 = vpack.c.b16 %v294, %v294
    %v297 = vpack.c.b16 %v295, %v295
    %300 = vst [vmem:[#allocation10] sm:$0xf] %v296
    %301 = vst [vmem:[#allocation10 + $0x4] sm:$0xf] %v297
    %v302 = vpack.c.bf16 %v290, %v286
    %v304 = vunpack.c.l.b16 %v302
    %v305 = vunpack.c.h.b16 %v302
    %v306 = vpack.c.b16 %v304, %v304
    %v307 = vpack.c.b16 %v305, %v305
    %310 = vst [vmem:[#allocation11] sm:$0xf] %v306
    %311 = vst [vmem:[#allocation11 + $0x4] sm:$0xf] %v307
    // Predicated region
    $region42: #{tpu_custom_call.1} parent=1 // pred_check
      _
    $region43: #{tpu_custom_call.1} parent=1 // pred_check_branch
      %313 = sbr.rel (0) target = $region45
    $region44: #{tpu_custom_call.1} parent=1 // pred_region
      %s315 = ssub.s32 128, 128
      %316 = vsyncadd [#allocation4], %s315
      %s317 = sshll.u32 [#allocation10], 4
      %s318 = int_to_ptr.vmem [resolvable:$true] %s317
      %323 = dma.vmem_to_hbm [thread:$0]  %s318, 128, %s6, [#allocation4], 64, 64, 4
    $region45: #{tpu_custom_call.1} parent=1 // pred_fallthru
      _
    // Predicated region
    $region46: #{tpu_custom_call.1} parent=1 // pred_check
      _
    $region47: #{tpu_custom_call.1} parent=1 // pred_check_branch
      %325 = sbr.rel (0) target = $region49
    $region48: #{tpu_custom_call.1} parent=1 // pred_region
      %s327 = ssub.s32 128, 128
      %328 = vsyncadd [#allocation12], %s327
      %s329 = sshll.u32 [#allocation11], 4
      %s330 = int_to_ptr.vmem [resolvable:$true] %s329
      %335 = dma.vmem_to_hbm [thread:$0]  %s330, 128, %s7, [#allocation12], 64, 64, 4
    $region49: #{tpu_custom_call.1} parent=1 // pred_fallthru
      _
    // Predicated region
    $region50: #{tpu_custom_call.1} parent=1 // pred_check
      _
    $region51: #{tpu_custom_call.1} parent=1 // pred_check_branch
      %337 = sbr.rel (0) target = $region53
    $region52: #{tpu_custom_call.1} parent=1 // pred_region
      %338 = dma.done [#allocation4], 128
    $region53: #{tpu_custom_call.1} parent=1 // pred_fallthru
      _
    // Predicated region
    $region54: #{tpu_custom_call.1} parent=1 // pred_check
      _
    $region55: #{tpu_custom_call.1} parent=1 // pred_check_branch
      %340 = sbr.rel (0) target = $region57
    $region56: #{tpu_custom_call.1} parent=1 // pred_region
      %341 = dma.done [#allocation12], 128
    $region57: #{tpu_custom_call.1} parent=1 // pred_fallthru
      _
    %342 = vsyncpa [#allocation3], 1
    %343 = vsyncpa [#allocation6], 1
    %344 = vsyncpa [#allocation9], 1
    %345 = vsyncpa [#allocation4], 1
    %346 = vsyncpa [#allocation12], 1

</llo_original>
